<compile_context>
chip_gen: v6e
topology: v6e:2x2x1
jax: 0.10.0
libtpu: 0.0.40
codegen_flags: <defaults>
</compile_context>

<pallas_src>
from functools import partial

import jax
import jax.numpy as jnp
from jax.experimental import pallas as pl
from jax.experimental.pallas import tpu as pltpu


def _round_up(x, m):
    return ((x + m - 1) // m) * m


def _temporal_block_kernel(*refs, K, dilation, P, CW, has_downsample,
                           multi_tile):
    # inputs: x (1, C_in, TL), w1 (C_out, K*C_in), b1 (C_out, 1),
    #         w2 (C_out, K*C_out), b2 (C_out, 1), [wd (C_out, C_in), bd]
    # output: (1, C_out, TL)
    # scratch: xw (C_in, CW+TL), x1 (K*C_in, TL), h1w (C_out, CW+TL),
    #          x2 (K*C_out, TL)
    x_ref, w1_ref, b1_ref, w2_ref, b2_ref = refs[:5]
    i = 5
    if has_downsample:
        wd_ref, bd_ref = refs[i], refs[i + 1]
        i += 2
    out_ref = refs[i]
    xw_ref, x1_ref, h1w_ref, x2_ref = refs[i + 1:i + 5]

    l = pl.program_id(1)
    c_in = x_ref.shape[1]
    c_out = out_ref.shape[1]
    tl = x_ref.shape[2]

    x_cur = x_ref[0]                                       # (C_in, TL)

    # Causal left halo: zero at the start of every sequence (== the zeros that
    # symmetric padding + Chomp1d produce). In multi-tile mode it otherwise
    # holds the previous tile's tail, written at the bottom of this kernel.
    @pl.when(l == 0)
    def _():
        xw_ref[:, :CW] = jnp.zeros((c_in, CW), xw_ref.dtype)
        h1w_ref[:, :CW] = jnp.zeros((c_out, CW), h1w_ref.dtype)

    # Stage the current tile into the window; CW is a multiple of 128 so this
    # store is lane-aligned.
    xw_ref[:, CW:] = x_cur
    xw = xw_ref[...]                                       # (C_in, CW + TL)

    # ---- conv1: im2col (K dilated taps stacked on channels) + ONE MXU matmul
    #      with contraction K*C_in, f32 accumulation. ----
    for k in range(K):
        s = CW - P + k * dilation
        x1_ref[k * c_in:(k + 1) * c_in, :] = xw[:, s:s + tl]
    h1 = jnp.dot(w1_ref[...], x1_ref[...],
                 preferred_element_type=jnp.float32) + b1_ref[...]
    h1 = jnp.maximum(h1, 0.0)                              # dropout1 == identity (eval)

    # ---- conv2 over the causally re-padded conv1 activation, same scheme ----
    h1w_ref[:, CW:] = h1.astype(h1w_ref.dtype)
    h1w = h1w_ref[...]                                     # (C_out, CW + TL)
    for k in range(K):
        s = CW - P + k * dilation
        x2_ref[k * c_out:(k + 1) * c_out, :] = h1w[:, s:s + tl]
    h2 = jnp.dot(w2_ref[...], x2_ref[...],
                 preferred_element_type=jnp.float32) + b2_ref[...]
    h2 = jnp.maximum(h2, 0.0)                              # dropout2 == identity (eval)

    # ---- residual (1x1 downsample conv iff C_in != C_out) + final ReLU ----
    if has_downsample:
        res = jnp.dot(wd_ref[...], x_cur,
                      preferred_element_type=jnp.float32) + bd_ref[...]
    else:
        res = x_cur.astype(jnp.float32)
    out_ref[0] = jnp.maximum(h2 + res, 0.0).astype(out_ref.dtype)

    # Carry the last CW columns of x and of relu(conv1(x)) into the next
    # tile's causal halo (TL >= CW is enforced by the wrapper).
    if multi_tile:
        xw_ref[:, :CW] = xw[:, tl:tl + CW]
        h1w_ref[:, :CW] = h1w[:, tl:tl + CW]


def temporal_block_forward(x, params, *, kernel_size, dilation, padding,
                           compute_dtype=jnp.float32, l_tile=512):
    """TemporalBlock forward. x: (N, C_in, L) float32 (PyTorch NCL).

    params = (w1, b1, w2, b2, wd, bd) in PyTorch layouts:
      w1: (C_out, C_in, K)   b1: (C_out,)
      w2: (C_out, C_out, K)  b2: (C_out,)
      wd: (C_out, C_in) or None, bd: (C_out,) or None   (1x1 downsample)
    Returns (N, C_out, L) in x.dtype.
    """
    w1, b1, w2, b2, wd, bd = params
    N, C_in, L = x.shape
    C_out, _, K = w1.shape
    assert K == kernel_size
    P = padding
    # TCN convention: symmetric pad + Chomp1d == left-only causal pad of P.
    assert P == (K - 1) * dilation and P >= 1, \
        "TemporalBlock requires padding == (kernel_size-1)*dilation >= 1"
    has_downsample = wd is not None
    assert has_downsample == (C_in != C_out)

    out_dtype = x.dtype
    cdt = jnp.dtype(compute_dtype)

    # L tiling: lane-axis tiles of TL columns. CW is the causal halo rounded up
    # to a lane tile so all window stores stay 128-aligned.
    assert l_tile % 128 == 0
    CW = _round_up(P, 128)
    TL = max(l_tile, CW)
    if L <= TL:
        TL, Lp, ntiles = L, L, 1
    else:
        ntiles = pl.cdiv(L, TL)
        Lp = ntiles * TL
    multi_tile = ntiles > 1

    x_in = x
    if Lp != L:
        x_in = jnp.pad(x_in, ((0, 0), (0, 0), (0, Lp - L)))
    x_in = x_in.astype(cdt)

    # Flatten weights for the im2col matmul: (C_out, C_in, K) -> (C_out, K*C_in)
    # ordered [tap0 channels, tap1 channels, ...] to match the kernel staging.
    w1f = jnp.transpose(w1, (0, 2, 1)).reshape(C_out, K * C_in).astype(cdt)
    w2f = jnp.transpose(w2, (0, 2, 1)).reshape(C_out, K * C_out).astype(cdt)
    b1c = b1.reshape(C_out, 1).astype(jnp.float32)
    b2c = b2.reshape(C_out, 1).astype(jnp.float32)

    args = [x_in, w1f, b1c, w2f, b2c]
    in_specs = [
        pl.BlockSpec((1, C_in, TL), lambda b, l: (b, 0, l)),
        pl.BlockSpec((C_out, K * C_in), lambda b, l: (0, 0)),
        pl.BlockSpec((C_out, 1), lambda b, l: (0, 0)),
        pl.BlockSpec((C_out, K * C_out), lambda b, l: (0, 0)),
        pl.BlockSpec((C_out, 1), lambda b, l: (0, 0)),
    ]
    if has_downsample:
        args += [wd.astype(cdt), bd.reshape(C_out, 1).astype(jnp.float32)]
        in_specs += [pl.BlockSpec((C_out, C_in), lambda b, l: (0, 0)),
                     pl.BlockSpec((C_out, 1), lambda b, l: (0, 0))]

    scratch_shapes = [
        pltpu.VMEM((C_in, CW + TL), cdt),      # causal window of x
        pltpu.VMEM((K * C_in, TL), cdt),       # im2col staging for conv1
        pltpu.VMEM((C_out, CW + TL), cdt),     # causal window of relu(conv1)
        pltpu.VMEM((K * C_out, TL), cdt),      # im2col staging for conv2
    ]

    # Explicit VMEM budget; cap at 64 MiB so the tiling also fits v7x.
    esz = cdt.itemsize
    osz = jnp.dtype(out_dtype).itemsize
    est = (2 * C_in * TL * esz                       # double-buffered x block
           + 2 * C_out * TL * osz                    # double-buffered out block
           + 2 * esz * (C_out * K * C_in + C_out * K * C_out
                        + (C_out * C_in if has_downsample else 0) + 4 * C_out)
           + esz * ((C_in + C_out) * (CW + TL) + K * (C_in + C_out) * TL)
           + (4 << 20))                              # headroom for live vregs
    vmem_limit = int(min(64 << 20, max(32 << 20, 2 * est)))

    kernel = partial(_temporal_block_kernel, K=K, dilation=dilation, P=P,
                     CW=CW, has_downsample=has_downsample,
                     multi_tile=multi_tile)

    out = pl.pallas_call(
        kernel,
        out_shape=jax.ShapeDtypeStruct((N, C_out, Lp), out_dtype),
        grid_spec=pltpu.PrefetchScalarGridSpec(
            num_scalar_prefetch=0,
            grid=(N, ntiles),
            in_specs=in_specs,
            out_specs=pl.BlockSpec((1, C_out, TL), lambda b, l: (b, 0, l)),
            scratch_shapes=scratch_shapes),
        compiler_params=pltpu.CompilerParams(
            # Batch axis shards across TensorCores; the L-tile axis is
            # sequential because the causal halo is carried in VMEM scratch.
            dimension_semantics=("parallel", "arbitrary"),
            vmem_limit_bytes=vmem_limit),
    )(*args)

    return out[:, :, :L] if Lp != L else out


def make_params(key, C_in, C_out, K):
    """Deterministic init mirroring the module: weight_norm(Conv1d) with
    v ~ N(0, 0.01) (init_weights) => w == g*v/||v|| == v at init; Conv1d
    biases use the default U(-1/sqrt(fan_in), 1/sqrt(fan_in))."""
    ks = jax.random.split(key, 6)

    def wn_weight(k, o, i, ksz):
        v = 0.01 * jax.random.normal(k, (o, i, ksz), jnp.float32)
        g = jnp.sqrt(jnp.sum(v * v, axis=(1, 2), keepdims=True))
        return g * v / jnp.sqrt(jnp.sum(v * v, axis=(1, 2), keepdims=True))

    def bias(k, o, fan_in):
        bound = 1.0 / jnp.sqrt(jnp.float32(fan_in))
        return jax.random.uniform(k, (o,), jnp.float32, -bound, bound)

    w1 = wn_weight(ks[0], C_out, C_in, K)
    b1 = bias(ks[1], C_out, C_in * K)
    w2 = wn_weight(ks[2], C_out, C_out, K)
    b2 = bias(ks[3], C_out, C_out * K)
    if C_in != C_out:
        wd = 0.01 * jax.random.normal(ks[4], (C_out, C_in), jnp.float32)
        bd = bias(ks[5], C_out, C_in)
    else:
        wd, bd = None, None
    return (w1, b1, w2, b2, wd, bd)


def _reference_forward(x, params, *, kernel_size, dilation, padding):
    """Pure-JAX reference matching PyTorch Conv1d + Chomp1d semantics (f32)."""
    w1, b1, w2, b2, wd, bd = params
    L = x.shape[2]

    def conv(inp, w, b):
        y = jax.lax.conv_general_dilated(
            inp, w, window_strides=(1,), padding=[(padding, padding)],
            rhs_dilation=(dilation,),
            dimension_numbers=("NCH", "OIH", "NCH"))
        return y + b.reshape(1, -1, 1)

    h = jnp.maximum(conv(x, w1, b1)[:, :, :L], 0.0)
    h = jnp.maximum(conv(h, w2, b2)[:, :, :L], 0.0)
    if wd is not None:
        res = jnp.einsum("ncl,oc->nol", x, wd) + bd.reshape(1, -1, 1)
    else:
        res = x
    return jnp.maximum(h + res, 0.0)


if __name__ == "__main__":
    key = jax.random.PRNGKey(0)
    configs = [
        # tiny, single L-tile, downsample residual, f32
        dict(N=2, C_in=4, C_out=8, K=3, dilation=2, L=16, l_tile=512,
             compute_dtype=jnp.float32, tol=1e-4),
        # multi-tile (carried causal halo), identity residual, f32
        dict(N=2, C_in=8, C_out=8, K=3, dilation=4, L=256, l_tile=128,
             compute_dtype=jnp.float32, tol=1e-4),
        # bf16 MXU matmuls, ragged L (right-pad path), downsample residual
        dict(N=2, C_in=4, C_out=8, K=2, dilation=3, L=200, l_tile=128,
             compute_dtype=jnp.bfloat16, tol=2e-2),
    ]
    for idx, cfg in enumerate(configs):
        kx, kp, key = jax.random.split(key, 3)
        N, C_in, C_out = cfg["N"], cfg["C_in"], cfg["C_out"]
        K, d, L = cfg["K"], cfg["dilation"], cfg["L"]
        padding = (K - 1) * d

        x = jax.random.normal(kx, (N, C_in, L), jnp.float32)
        params = make_params(kp, C_in, C_out, K)

        out = temporal_block_forward(
            x, params, kernel_size=K, dilation=d, padding=padding,
            compute_dtype=cfg["compute_dtype"], l_tile=cfg["l_tile"])
        out = jax.block_until_ready(out)

        ref = _reference_forward(x, params, kernel_size=K, dilation=d,
                                 padding=padding)
        assert out.shape == (N, C_out, L)
        assert jnp.allclose(out, ref, rtol=cfg["tol"], atol=cfg["tol"]), \
            f"config {idx} mismatch"

    print("KERNEL_OK")
</pallas_src>

<mosaic_0001>
module attributes {stable_mosaic.version = 11 : i64} {
  func.func @_temporal_block_kernel(%arg0: i32, %arg1: i32, %arg2: memref<1x4x16xf32, #tpu.memory_space<vmem>>, %arg3: memref<8x12xf32, #tpu.memory_space<vmem>>, %arg4: memref<8x1xf32, #tpu.memory_space<vmem>>, %arg5: memref<8x24xf32, #tpu.memory_space<vmem>>, %arg6: memref<8x1xf32, #tpu.memory_space<vmem>>, %arg7: memref<8x4xf32, #tpu.memory_space<vmem>>, %arg8: memref<8x1xf32, #tpu.memory_space<vmem>>, %arg9: memref<1x8x16xf32, #tpu.memory_space<vmem>>, %arg10: memref<4x144xf32, #tpu.memory_space<vmem>>, %arg11: memref<12x16xf32, #tpu.memory_space<vmem>>, %arg12: memref<8x144xf32, #tpu.memory_space<vmem>>, %arg13: memref<24x16xf32, #tpu.memory_space<vmem>>) attributes {dimension_semantics = [#tpu.dimension_semantics<parallel>, #tpu.dimension_semantics<arbitrary>], iteration_bounds = array<i64: 2, 1>, scalar_prefetch = 0 : i64, scratch_operands = 4 : i64, tpu.core_type = #tpu.core_type<tc>, window_params = [{transform_indices = @transform_0, window_bounds = array<i64: 1, 4, 16>}, {pipeline_mode = #tpu.pipeline_mode<synchronous>, transform_indices = @transform_1, window_bounds = array<i64: 8, 12>}, {pipeline_mode = #tpu.pipeline_mode<synchronous>, transform_indices = @transform_2, window_bounds = array<i64: 8, 1>}, {pipeline_mode = #tpu.pipeline_mode<synchronous>, transform_indices = @transform_3, window_bounds = array<i64: 8, 24>}, {pipeline_mode = #tpu.pipeline_mode<synchronous>, transform_indices = @transform_4, window_bounds = array<i64: 8, 1>}, {pipeline_mode = #tpu.pipeline_mode<synchronous>, transform_indices = @transform_5, window_bounds = array<i64: 8, 4>}, {pipeline_mode = #tpu.pipeline_mode<synchronous>, transform_indices = @transform_6, window_bounds = array<i64: 8, 1>}, {transform_indices = @transform_7, window_bounds = array<i64: 1, 8, 16>}]} {
    %c0 = arith.constant 0 : index
    %c0_0 = arith.constant 0 : index
    %c0_1 = arith.constant 0 : index
    %0 = vector.load %arg2[%c0, %c0_0, %c0_1] : memref<1x4x16xf32, #tpu.memory_space<vmem>>, vector<1x4x16xf32>
    %1 = vector.shape_cast %0 : vector<1x4x16xf32> to vector<4x16xf32>
    %c0_i32 = arith.constant 0 : i32
    %2 = arith.cmpi eq, %arg1, %c0_i32 : i32
    %3 = arith.extui %2 : i1 to i32
    %c0_i32_2 = arith.constant 0 : i32
    %4 = arith.cmpi ne, %3, %c0_i32_2 : i32
    scf.if %4 {
      %cst_43 = arith.constant 0.000000e+00 : f32
      %48 = vector.broadcast %cst_43 : f32 to vector<4x128xf32>
      %c0_44 = arith.constant 0 : index
      %c0_45 = arith.constant 0 : index
      %49 = vector.load %arg10[%c0_44, %c0_45] : memref<4x144xf32, #tpu.memory_space<vmem>>, vector<4x128xf32>
      tpu.vector_store %arg10[%c0_44, %c0_45], %48 {strides = array<i32>} : memref<4x144xf32, #tpu.memory_space<vmem>>, vector<4x128xf32>,
      %cst_46 = arith.constant 0.000000e+00 : f32
      %50 = vector.broadcast %cst_46 : f32 to vector<8x128xf32>
      %c0_47 = arith.constant 0 : index
      %c0_48 = arith.constant 0 : index
      %51 = vector.load %arg12[%c0_47, %c0_48] : memref<8x144xf32, #tpu.memory_space<vmem>>, vector<8x128xf32>
      tpu.vector_store %arg12[%c0_47, %c0_48], %50 {strides = array<i32>} : memref<8x144xf32, #tpu.memory_space<vmem>>, vector<8x128xf32>,
    } else {
    }
    %c0_3 = arith.constant 0 : index
    %c128 = arith.constant 128 : index
    %5 = vector.load %arg10[%c0_3, %c128] : memref<4x144xf32, #tpu.memory_space<vmem>>, vector<4x16xf32>
    tpu.vector_store %arg10[%c0_3, %c128], %1 {strides = array<i32>} : memref<4x144xf32, #tpu.memory_space<vmem>>, vector<4x16xf32>,
    %c0_4 = arith.constant 0 : index
    %c0_5 = arith.constant 0 : index
    %6 = vector.load %arg10[%c0_4, %c0_5] : memref<4x144xf32, #tpu.memory_space<vmem>>, vector<4x144xf32>
    %7 = vector.extract_strided_slice %6 {offsets = [0, 124], sizes = [4, 16], strides = [1, 1]} : vector<4x144xf32> to vector<4x16xf32>
    %c0_6 = arith.constant 0 : index
    %c0_7 = arith.constant 0 : index
    %8 = vector.load %arg11[%c0_6, %c0_7] : memref<12x16xf32, #tpu.memory_space<vmem>>, vector<4x16xf32>
    tpu.vector_store %arg11[%c0_6, %c0_7], %7 {strides = array<i32>} : memref<12x16xf32, #tpu.memory_space<vmem>>, vector<4x16xf32>,
    %9 = vector.extract_strided_slice %6 {offsets = [0, 126], sizes = [4, 16], strides = [1, 1]} : vector<4x144xf32> to vector<4x16xf32>
    %c4 = arith.constant 4 : index
    %c0_8 = arith.constant 0 : index
    %10 = vector.load %arg11[%c4, %c0_8] : memref<12x16xf32, #tpu.memory_space<vmem>>, vector<4x16xf32>
    tpu.vector_store %arg11[%c4, %c0_8], %9 {strides = array<i32>} : memref<12x16xf32, #tpu.memory_space<vmem>>, vector<4x16xf32>,
    %11 = vector.extract_strided_slice %6 {offsets = [0, 128], sizes = [4, 16], strides = [1, 1]} : vector<4x144xf32> to vector<4x16xf32>
    %c8 = arith.constant 8 : index
    %c0_9 = arith.constant 0 : index
    %12 = vector.load %arg11[%c8, %c0_9] : memref<12x16xf32, #tpu.memory_space<vmem>>, vector<4x16xf32>
    tpu.vector_store %arg11[%c8, %c0_9], %11 {strides = array<i32>} : memref<12x16xf32, #tpu.memory_space<vmem>>, vector<4x16xf32>,
    %c0_10 = arith.constant 0 : index
    %c0_11 = arith.constant 0 : index
    %13 = vector.load %arg3[%c0_10, %c0_11] : memref<8x12xf32, #tpu.memory_space<vmem>>, vector<8x12xf32>
    %c0_12 = arith.constant 0 : index
    %c0_13 = arith.constant 0 : index
    %14 = vector.load %arg11[%c0_12, %c0_13] : memref<12x16xf32, #tpu.memory_space<vmem>>, vector<12x16xf32>
    %cst = arith.constant dense<0.000000e+00> : vector<8x16xf32>
    %15 = tpu.matmul %13, %14, %cst {dimension_numbers = #tpu.dot_dimension_numbers<[1], [0], [0], [1], [0, 0, 1, 1], [], []>} : vector<8x12xf32>, vector<12x16xf32>, vector<8x16xf32> -> vector<8x16xf32>
    %c0_14 = arith.constant 0 : index
    %c0_15 = arith.constant 0 : index
    %16 = vector.load %arg4[%c0_14, %c0_15] : memref<8x1xf32, #tpu.memory_space<vmem>>, vector<8x1xf32>
    %17 = vector.broadcast %16 : vector<8x1xf32> to vector<8x16xf32>
    %18 = arith.addf %15, %17 : vector<8x16xf32>
    %cst_16 = arith.constant 0.000000e+00 : f32
    %19 = vector.broadcast %cst_16 : f32 to vector<8x16xf32>
    %20 = arith.maximumf %18, %19 : vector<8x16xf32>
    %c0_17 = arith.constant 0 : index
    %c128_18 = arith.constant 128 : index
    %21 = vector.load %arg12[%c0_17, %c128_18] : memref<8x144xf32, #tpu.memory_space<vmem>>, vector<8x16xf32>
    tpu.vector_store %arg12[%c0_17, %c128_18], %20 {strides = array<i32>} : memref<8x144xf32, #tpu.memory_space<vmem>>, vector<8x16xf32>,
    %c0_19 = arith.constant 0 : index
    %c0_20 = arith.constant 0 : index
    %22 = vector.load %arg12[%c0_19, %c0_20] : memref<8x144xf32, #tpu.memory_space<vmem>>, vector<8x144xf32>
    %23 = vector.extract_strided_slice %22 {offsets = [0, 124], sizes = [8, 16], strides = [1, 1]} : vector<8x144xf32> to vector<8x16xf32>
    %c0_21 = arith.constant 0 : index
    %c0_22 = arith.constant 0 : index
    %24 = vector.load %arg13[%c0_21, %c0_22] : memref<24x16xf32, #tpu.memory_space<vmem>>, vector<8x16xf32>
    tpu.vector_store %arg13[%c0_21, %c0_22], %23 {strides = array<i32>} : memref<24x16xf32, #tpu.memory_space<vmem>>, vector<8x16xf32>,
    %25 = vector.extract_strided_slice %22 {offsets = [0, 126], sizes = [8, 16], strides = [1, 1]} : vector<8x144xf32> to vector<8x16xf32>
    %c8_23 = arith.constant 8 : index
    %c0_24 = arith.constant 0 : index
    %26 = vector.load %arg13[%c8_23, %c0_24] : memref<24x16xf32, #tpu.memory_space<vmem>>, vector<8x16xf32>
    tpu.vector_store %arg13[%c8_23, %c0_24], %25 {strides = array<i32>} : memref<24x16xf32, #tpu.memory_space<vmem>>, vector<8x16xf32>,
    %27 = vector.extract_strided_slice %22 {offsets = [0, 128], sizes = [8, 16], strides = [1, 1]} : vector<8x144xf32> to vector<8x16xf32>
    %c16 = arith.constant 16 : index
    %c0_25 = arith.constant 0 : index
    %28 = vector.load %arg13[%c16, %c0_25] : memref<24x16xf32, #tpu.memory_space<vmem>>, vector<8x16xf32>
    tpu.vector_store %arg13[%c16, %c0_25], %27 {strides = array<i32>} : memref<24x16xf32, #tpu.memory_space<vmem>>, vector<8x16xf32>,
    %c0_26 = arith.constant 0 : index
    %c0_27 = arith.constant 0 : index
    %29 = vector.load %arg5[%c0_26, %c0_27] : memref<8x24xf32, #tpu.memory_space<vmem>>, vector<8x24xf32>
    %c0_28 = arith.constant 0 : index
    %c0_29 = arith.constant 0 : index
    %30 = vector.load %arg13[%c0_28, %c0_29] : memref<24x16xf32, #tpu.memory_space<vmem>>, vector<24x16xf32>
    %cst_30 = arith.constant dense<0.000000e+00> : vector<8x16xf32>
    %31 = tpu.matmul %29, %30, %cst_30 {dimension_numbers = #tpu.dot_dimension_numbers<[1], [0], [0], [1], [0, 0, 1, 1], [], []>} : vector<8x24xf32>, vector<24x16xf32>, vector<8x16xf32> -> vector<8x16xf32>
    %c0_31 = arith.constant 0 : index
    %c0_32 = arith.constant 0 : index
    %32 = vector.load %arg6[%c0_31, %c0_32] : memref<8x1xf32, #tpu.memory_space<vmem>>, vector<8x1xf32>
    %33 = vector.broadcast %32 : vector<8x1xf32> to vector<8x16xf32>
    %34 = arith.addf %31, %33 : vector<8x16xf32>
    %cst_33 = arith.constant 0.000000e+00 : f32
    %35 = vector.broadcast %cst_33 : f32 to vector<8x16xf32>
    %36 = arith.maximumf %34, %35 : vector<8x16xf32>
    %c0_34 = arith.constant 0 : index
    %c0_35 = arith.constant 0 : index
    %37 = vector.load %arg7[%c0_34, %c0_35] : memref<8x4xf32, #tpu.memory_space<vmem>>, vector<8x4xf32>
    %cst_36 = arith.constant dense<0.000000e+00> : vector<8x16xf32>
    %38 = tpu.matmul %37, %1, %cst_36 {dimension_numbers = #tpu.dot_dimension_numbers<[1], [0], [0], [1], [0, 0, 1, 1], [], []>} : vector<8x4xf32>, vector<4x16xf32>, vector<8x16xf32> -> vector<8x16xf32>
    %c0_37 = arith.constant 0 : index
    %c0_38 = arith.constant 0 : index
    %39 = vector.load %arg8[%c0_37, %c0_38] : memref<8x1xf32, #tpu.memory_space<vmem>>, vector<8x1xf32>
    %40 = vector.broadcast %39 : vector<8x1xf32> to vector<8x16xf32>
    %41 = arith.addf %38, %40 : vector<8x16xf32>
    %42 = arith.addf %36, %41 : vector<8x16xf32>
    %cst_39 = arith.constant 0.000000e+00 : f32
    %43 = vector.broadcast %cst_39 : f32 to vector<8x16xf32>
    %44 = arith.maximumf %42, %43 : vector<8x16xf32>
    %c0_40 = arith.constant 0 : index
    %c0_41 = arith.constant 0 : index
    %c0_42 = arith.constant 0 : index
    %45 = vector.load %arg9[%c0_40, %c0_41, %c0_42] : memref<1x8x16xf32, #tpu.memory_space<vmem>>, vector<1x8x16xf32>
    %46 = vector.shape_cast %45 : vector<1x8x16xf32> to vector<8x16xf32>
    %47 = vector.shape_cast %44 : vector<8x16xf32> to vector<1x8x16xf32>
    tpu.vector_store %arg9[%c0_40, %c0_41, %c0_42], %47 {strides = array<i32>} : memref<1x8x16xf32, #tpu.memory_space<vmem>>, vector<1x8x16xf32>,
    return
  }
  func.func @transform_0(%arg0: i32, %arg1: i32) -> (i32, i32, i32) {
    %c0_i32 = arith.constant 0 : i32
    %c0_i32_0 = arith.constant 0 : i32
    return %arg0, %c0_i32, %arg1 : i32, i32, i32
  }
  func.func @transform_1(%arg0: i32, %arg1: i32) -> (i32, i32) {
    %c0_i32 = arith.constant 0 : i32
    %c0_i32_0 = arith.constant 0 : i32
    %c0_i32_1 = arith.constant 0 : i32
    return %c0_i32, %c0_i32_0 : i32, i32
  }
  func.func @transform_2(%arg0: i32, %arg1: i32) -> (i32, i32) {
    %c0_i32 = arith.constant 0 : i32
    %c0_i32_0 = arith.constant 0 : i32
    %c0_i32_1 = arith.constant 0 : i32
    return %c0_i32, %c0_i32_0 : i32, i32
  }
  func.func @transform_3(%arg0: i32, %arg1: i32) -> (i32, i32) {
    %c0_i32 = arith.constant 0 : i32
    %c0_i32_0 = arith.constant 0 : i32
    %c0_i32_1 = arith.constant 0 : i32
    return %c0_i32, %c0_i32_0 : i32, i32
  }
  func.func @transform_4(%arg0: i32, %arg1: i32) -> (i32, i32) {
    %c0_i32 = arith.constant 0 : i32
    %c0_i32_0 = arith.constant 0 : i32
    %c0_i32_1 = arith.constant 0 : i32
    return %c0_i32, %c0_i32_0 : i32, i32
  }
  func.func @transform_5(%arg0: i32, %arg1: i32) -> (i32, i32) {
    %c0_i32 = arith.constant 0 : i32
    %c0_i32_0 = arith.constant 0 : i32
    %c0_i32_1 = arith.constant 0 : i32
    return %c0_i32, %c0_i32_0 : i32, i32
  }
  func.func @transform_6(%arg0: i32, %arg1: i32) -> (i32, i32) {
    %c0_i32 = arith.constant 0 : i32
    %c0_i32_0 = arith.constant 0 : i32
    %c0_i32_1 = arith.constant 0 : i32
    return %c0_i32, %c0_i32_0 : i32, i32
  }
  func.func @transform_7(%arg0: i32, %arg1: i32) -> (i32, i32, i32) {
    %c0_i32 = arith.constant 0 : i32
    %c0_i32_0 = arith.constant 0 : i32
    return %arg0, %c0_i32, %arg1 : i32, i32, i32
  }
}

</mosaic_0001>

<llo_original>
// kernel: tpu_custom_call.1
$region0: #{tpu_custom_call.1}
  #allocation0 [shape = 'u32[]', space=smem, size = 0x4, offset = 0x4, fixed_abs, tag = 'smem constant byte address 0x4 - core index']
  #allocation1 [shape = 'u32[144,128]{1,0:T(1,128)}', space=vmem, size = 0x12000, scoped, tag = 'internal scratch']
  #allocation2 [shape = 'f32[4,144]{1,0:T(4,128)}', space=vmem, size = 0x1000, scoped, tag = 'scratch operand']
  #allocation3 [shape = 'f32[12,16]{1,0:T(8,128)}', space=vmem, size = 0x2000, scoped, tag = 'scratch operand']
  #allocation4 [shape = 'f32[8,144]{1,0:T(8,128)}', space=vmem, size = 0x2000, scoped, tag = 'scratch operand']
  #allocation5 [shape = 'f32[24,16]{1,0:T(8,128)}', space=vmem, size = 0x3000, scoped, tag = 'scratch operand']
  %s0 = inlined_call_operand.vmem [shape: f32[2,4,16], index: 0, kind: input, shape index: {}]
  %s1 = inlined_call_operand.vmem [shape: f32[8,12], index: 1, kind: input, shape index: {}]
  %s2 = inlined_call_operand.vmem [shape: f32[8,1], index: 2, kind: input, shape index: {}]
  %s3 = inlined_call_operand.vmem [shape: f32[8,24], index: 3, kind: input, shape index: {}]
  %s4 = inlined_call_operand.vmem [shape: f32[8,1], index: 4, kind: input, shape index: {}]
  %s5 = inlined_call_operand.vmem [shape: f32[8,4], index: 5, kind: input, shape index: {}]
  %s6 = inlined_call_operand.vmem [shape: f32[8,1], index: 6, kind: input, shape index: {}]
  %s7 = inlined_call_operand.hbm [shape: f32[2,8,16], index: 7, kind: output, shape index: {}]
  %s8 = sld [smem:[#allocation0]]
  $region65: #{tpu_custom_call.1} parent=0
    _
  %s10 = ssub.s32 1, %s8
  %s11 = scalar_select 0, %s10, %s8
  $region1: #{tpu_custom_call.1} parent=0
    #allocation6 [shape = 'u8[8192]{0}', space=vmem, size = 0x2000, scoped, tag = 'output window, operand 0']
    #allocation7 [shape = 's32[2]{0}', space=sflag, size = 0x8, scoped, tag = 'scoped memory for tpu_custom_call.1']
    %12 = vsyncpa [#allocation7], 0
    %s13 = scalar_lea.sflag [#allocation7], 1
    %14 = vsyncpa %s13, 0
    loop: start=0, step=1, limit=4
    $region2: #{tpu_custom_call.1} parent=1 // loop_pre_header
      _
    $region3: #{tpu_custom_call.1} parent=1 // loop_header
      %s16 = sphi 0, %s20
      %p17 = scmp.ge.s32.totalorder %s16, 4
      %s23 = sphi 0, %s35
      %s24 = sphi 0, %s31
      %s25 = sphi 0, %s23
      %s26 = sphi 0, %s24
      %s27 = sphi 0, %s25
      %s28 = sphi 0, %s26
      %s40 = sphi 0, %s42
      %s43 = sphi 0, %s40
      %s44 = sphi 0, %s43
      %s60 = sphi 0, %s44
      %s64 = sphi 0, %s64
      %s66 = sphi 0, %s64
      %s67 = sphi 0, %s66
      %s81 = sphi 0, %s67
      %s85 = sphi 0, %s85
      %s87 = sphi 0, %s85
      %s88 = sphi 0, %s87
      %s102 = sphi 0, %s88
      %s106 = sphi 0, %s106
      %s108 = sphi 0, %s106
      %s109 = sphi 0, %s108
      %s123 = sphi 0, %s109
      %s127 = sphi 0, %s127
      %s129 = sphi 0, %s127
      %s130 = sphi 0, %s129
      %s144 = sphi 0, %s130
      %s148 = sphi 0, %s148
      %s150 = sphi 0, %s148
      %s151 = sphi 0, %s150
      %s165 = sphi 0, %s151
      %s169 = sphi 0, %s169
      %s171 = sphi 0, %s169
      %s172 = sphi 0, %s171
      %s186 = sphi 0, %s172
      %s194 = sphi 0, %s196
      %s197 = sphi 0, %s194
      %s198 = sphi 0, %s197
      %s214 = sphi 0, %s198
    $region4: #{tpu_custom_call.1} parent=1 // loop_header_branch
      %19 = sbr.rel (%p17) target = $region8
    $region5: #{tpu_custom_call.1} parent=1 // loop_body
      %s21 = ssub.s32 %s16, 1
      %s22 = ssub.s32 %s16, 2
      %s29 = sadd.s32 1, %s24
      %p30 = scmp.ge.s32.totalorder %s29, 1
      %s31 = scalar_select %p30, 0, %s29
      %s32 = sadd.s32 1, %s23
      %s33 = scalar_select %p30, %s32, %s23
      %p34 = scmp.ge.s32.totalorder %s33, 2
      %s35 = scalar_select %p34, 0, %s33
      %s36 = ssub.s32 %s23, %s35
      %s37 = ssub.s32 %s24, %s31
      %s38 = sor.u32 %s36, %s37
      %p39 = scmp.eq.s32.totalorder %s38, 0
      %s41 = sadd.s32 %s40, 1
      %s42 = scalar_select %p39, %s40, %s41
      %p45 = pneg %p39
      %p46 = scmp.eq.s32.totalorder %s16, 1
      %p47 = por %p45, %p46
      %p48 = scmp.ne.s32.totalorder %s40, %s43
      %p49 = scmp.eq.s32.totalorder %s16, 0
      %p50 = por %p48, %p49
      %p51 = scmp.ne.s32.totalorder %s40, %s43
      %p52 = scmp.eq.s32.totalorder %s21, 1
      %p53 = por %p51, %p52
      %p54 = scmp.ne.s32.totalorder %s43, %s44
      %p55 = scmp.eq.s32.totalorder %s21, 0
      %p56 = por %p54, %p55
      %p57 = scmp.ne.s32.totalorder %s43, %s44
      %p58 = scmp.eq.s32.totalorder %s22, 1
      %p59 = por %p57, %p58
      %p61 = scmp.ne.s32.totalorder %s44, %s60
      %p62 = scmp.eq.s32.totalorder %s22, 0
      %p63 = por %p61, %p62
      %s65 = sadd.s32 %s64, 1
      %p68 = scmp.eq.s32.totalorder %s16, 1
      %p69 = scmp.ne.s32.totalorder %s64, %s66
      %p70 = scmp.eq.s32.totalorder %s16, 0
      %p71 = por %p69, %p70
      %p72 = scmp.ne.s32.totalorder %s64, %s66
      %p73 = scmp.eq.s32.totalorder %s21, 1
      %p74 = por %p72, %p73
      %p75 = scmp.ne.s32.totalorder %s66, %s67
      %p76 = scmp.eq.s32.totalorder %s21, 0
      %p77 = por %p75, %p76
      %p78 = scmp.ne.s32.totalorder %s66, %s67
      %p79 = scmp.eq.s32.totalorder %s22, 1
      %p80 = por %p78, %p79
      %p82 = scmp.ne.s32.totalorder %s67, %s81
      %p83 = scmp.eq.s32.totalorder %s22, 0
      %p84 = por %p82, %p83
      %s86 = sadd.s32 %s85, 1
      %p89 = scmp.eq.s32.totalorder %s16, 1
      %p90 = scmp.ne.s32.totalorder %s85, %s87
      %p91 = scmp.eq.s32.totalorder %s16, 0
      %p92 = por %p90, %p91
      %p93 = scmp.ne.s32.totalorder %s85, %s87
      %p94 = scmp.eq.s32.totalorder %s21, 1
      %p95 = por %p93, %p94
      %p96 = scmp.ne.s32.totalorder %s87, %s88
      %p97 = scmp.eq.s32.totalorder %s21, 0
      %p98 = por %p96, %p97
      %p99 = scmp.ne.s32.totalorder %s87, %s88
      %p100 = scmp.eq.s32.totalorder %s22, 1
      %p101 = por %p99, %p100
      %p103 = scmp.ne.s32.totalorder %s88, %s102
      %p104 = scmp.eq.s32.totalorder %s22, 0
      %p105 = por %p103, %p104
      %s107 = sadd.s32 %s106, 1
      %p110 = scmp.eq.s32.totalorder %s16, 1
      %p111 = scmp.ne.s32.totalorder %s106, %s108
      %p112 = scmp.eq.s32.totalorder %s16, 0
      %p113 = por %p111, %p112
      %p114 = scmp.ne.s32.totalorder %s106, %s108
      %p115 = scmp.eq.s32.totalorder %s21, 1
      %p116 = por %p114, %p115
      %p117 = scmp.ne.s32.totalorder %s108, %s109
      %p118 = scmp.eq.s32.totalorder %s21, 0
      %p119 = por %p117, %p118
      %p120 = scmp.ne.s32.totalorder %s108, %s109
      %p121 = scmp.eq.s32.totalorder %s22, 1
      %p122 = por %p120, %p121
      %p124 = scmp.ne.s32.totalorder %s109, %s123
      %p125 = scmp.eq.s32.totalorder %s22, 0
      %p126 = por %p124, %p125
      %s128 = sadd.s32 %s127, 1
      %p131 = scmp.eq.s32.totalorder %s16, 1
      %p132 = scmp.ne.s32.totalorder %s127, %s129
      %p133 = scmp.eq.s32.totalorder %s16, 0
      %p134 = por %p132, %p133
      %p135 = scmp.ne.s32.totalorder %s127, %s129
      %p136 = scmp.eq.s32.totalorder %s21, 1
      %p137 = por %p135, %p136
      %p138 = scmp.ne.s32.totalorder %s129, %s130
      %p139 = scmp.eq.s32.totalorder %s21, 0
      %p140 = por %p138, %p139
      %p141 = scmp.ne.s32.totalorder %s129, %s130
      %p142 = scmp.eq.s32.totalorder %s22, 1
      %p143 = por %p141, %p142
      %p145 = scmp.ne.s32.totalorder %s130, %s144
      %p146 = scmp.eq.s32.totalorder %s22, 0
      %p147 = por %p145, %p146
      %s149 = sadd.s32 %s148, 1
      %p152 = scmp.eq.s32.totalorder %s16, 1
      %p153 = scmp.ne.s32.totalorder %s148, %s150
      %p154 = scmp.eq.s32.totalorder %s16, 0
      %p155 = por %p153, %p154
      %p156 = scmp.ne.s32.totalorder %s148, %s150
      %p157 = scmp.eq.s32.totalorder %s21, 1
      %p158 = por %p156, %p157
      %p159 = scmp.ne.s32.totalorder %s150, %s151
      %p160 = scmp.eq.s32.totalorder %s21, 0
      %p161 = por %p159, %p160
      %p162 = scmp.ne.s32.totalorder %s150, %s151
      %p163 = scmp.eq.s32.totalorder %s22, 1
      %p164 = por %p162, %p163
      %p166 = scmp.ne.s32.totalorder %s151, %s165
      %p167 = scmp.eq.s32.totalorder %s22, 0
      %p168 = por %p166, %p167
      %s170 = sadd.s32 %s169, 1
      %p173 = scmp.eq.s32.totalorder %s16, 1
      %p174 = scmp.ne.s32.totalorder %s169, %s171
      %p175 = scmp.eq.s32.totalorder %s16, 0
      %p176 = por %p174, %p175
      %p177 = scmp.ne.s32.totalorder %s169, %s171
      %p178 = scmp.eq.s32.totalorder %s21, 1
      %p179 = por %p177, %p178
      %p180 = scmp.ne.s32.totalorder %s171, %s172
      %p181 = scmp.eq.s32.totalorder %s21, 0
      %p182 = por %p180, %p181
      %p183 = scmp.ne.s32.totalorder %s171, %s172
      %p184 = scmp.eq.s32.totalorder %s22, 1
      %p185 = por %p183, %p184
      %p187 = scmp.ne.s32.totalorder %s172, %s186
      %p188 = scmp.eq.s32.totalorder %s22, 0
      %p189 = por %p187, %p188
      %s190 = ssub.s32 %s23, %s35
      %s191 = ssub.s32 %s24, %s31
      %s192 = sor.u32 %s190, %s191
      %p193 = scmp.eq.s32.totalorder %s192, 0
      %s195 = sadd.s32 %s194, 1
      %s196 = scalar_select %p193, %s194, %s195
      %p199 = pneg %p193
      %p200 = scmp.eq.s32.totalorder %s16, 1
      %p201 = por %p199, %p200
      %p202 = scmp.ne.s32.totalorder %s194, %s197
      %p203 = scmp.eq.s32.totalorder %s16, 0
      %p204 = por %p202, %p203
      %p205 = scmp.ne.s32.totalorder %s194, %s197
      %p206 = scmp.eq.s32.totalorder %s21, 1
      %p207 = por %p205, %p206
      %p208 = scmp.ne.s32.totalorder %s197, %s198
      %p209 = scmp.eq.s32.totalorder %s21, 0
      %p210 = por %p208, %p209
      %p211 = scmp.ne.s32.totalorder %s197, %s198
      %p212 = scmp.eq.s32.totalorder %s22, 1
      %p213 = por %p211, %p212
      %p215 = scmp.ne.s32.totalorder %s198, %s214
      %p216 = scmp.eq.s32.totalorder %s22, 0
      %p217 = por %p215, %p216
      %p218 = scmp.le.s32.totalorder 1, %s16
      %p219 = scmp.lt.s32.totalorder %s16, 3
      %p220 = pnand %p218, %p219
      %p221 = pneg %p220
      // Predicated region
      $region9: #{tpu_custom_call.1} parent=5 // pred_check
        _
      $region10: #{tpu_custom_call.1} parent=5 // pred_check_branch
        %223 = sbr.rel (%p220) target = $region12
      $region11: #{tpu_custom_call.1} parent=5 // pred_region
        %s224 = ssub.s32 %s16, 1
        // Predicated region
        $region13: #{tpu_custom_call.1} parent=11 // pred_check
          %p225 = pneg %p77
        $region14: #{tpu_custom_call.1} parent=11 // pred_check_branch
          %227 = sbr.rel (%p225) target = $region16
        $region15: #{tpu_custom_call.1} parent=11 // pred_region
          _
        $region16: #{tpu_custom_call.1} parent=11 // pred_fallthru
          _
        // Predicated region
        $region17: #{tpu_custom_call.1} parent=11 // pred_check
          %p228 = pneg %p98
        $region18: #{tpu_custom_call.1} parent=11 // pred_check_branch
          %230 = sbr.rel (%p228) target = $region20
        $region19: #{tpu_custom_call.1} parent=11 // pred_region
          _
        $region20: #{tpu_custom_call.1} parent=11 // pred_fallthru
          _
        // Predicated region
        $region21: #{tpu_custom_call.1} parent=11 // pred_check
          %p231 = pneg %p119
        $region22: #{tpu_custom_call.1} parent=11 // pred_check_branch
          %233 = sbr.rel (%p231) target = $region24
        $region23: #{tpu_custom_call.1} parent=11 // pred_region
          _
        $region24: #{tpu_custom_call.1} parent=11 // pred_fallthru
          _
        // Predicated region
        $region25: #{tpu_custom_call.1} parent=11 // pred_check
          %p234 = pneg %p140
        $region26: #{tpu_custom_call.1} parent=11 // pred_check_branch
          %236 = sbr.rel (%p234) target = $region28
        $region27: #{tpu_custom_call.1} parent=11 // pred_region
          _
        $region28: #{tpu_custom_call.1} parent=11 // pred_fallthru
          _
        // Predicated region
        $region29: #{tpu_custom_call.1} parent=11 // pred_check
          %p237 = pneg %p161
        $region30: #{tpu_custom_call.1} parent=11 // pred_check_branch
          %239 = sbr.rel (%p237) target = $region32
        $region31: #{tpu_custom_call.1} parent=11 // pred_region
          _
        $region32: #{tpu_custom_call.1} parent=11 // pred_fallthru
          _
        // Predicated region
        $region33: #{tpu_custom_call.1} parent=11 // pred_check
          %p240 = pneg %p182
        $region34: #{tpu_custom_call.1} parent=11 // pred_check_branch
          %242 = sbr.rel (%p240) target = $region36
        $region35: #{tpu_custom_call.1} parent=11 // pred_region
          _
        $region36: #{tpu_custom_call.1} parent=11 // pred_fallthru
          _
      $region12: #{tpu_custom_call.1} parent=5 // pred_fallthru
        _
      %p243 = scmp.lt.s32.totalorder %s16, 2
      // Predicated region
      $region37: #{tpu_custom_call.1} parent=5 // pred_check
        %p244 = pneg %p243
      $region38: #{tpu_custom_call.1} parent=5 // pred_check_branch
        %246 = sbr.rel (%p244) target = $region40
      $region39: #{tpu_custom_call.1} parent=5 // pred_region
        // Predicated region
        $region41: #{tpu_custom_call.1} parent=39 // pred_check
          %p247 = pneg %p50
        $region42: #{tpu_custom_call.1} parent=39 // pred_check_branch
          %249 = sbr.rel (%p247) target = $region44
        $region43: #{tpu_custom_call.1} parent=39 // pred_region
          %p250 = scmp.lt.s32.totalorder %s23, 1
          %s251 = scalar_select %p250, %s23, 1
          %p252 = scmp.lt.s32.totalorder %s24, 0
          %s253 = scalar_select %p252, %s24, 0
          %s254 = sadd.s32 %s253, %s251
          %s255 = smul.addr %s254, 4
          %s256 = scalar_lea.vmem %s0, %s255
        $region44: #{tpu_custom_call.1} parent=39 // pred_fallthru
          _
      $region40: #{tpu_custom_call.1} parent=5 // pred_fallthru
        _
      %p257 = scmp.le.s32.totalorder 1, %s16
      %p258 = scmp.lt.s32.totalorder %s16, 3
      %p259 = pnand %p257, %p258
      %p260 = pneg %p259
      // Predicated region
      $region45: #{tpu_custom_call.1} parent=5 // pred_check
        _
      $region46: #{tpu_custom_call.1} parent=5 // pred_check_branch
        %262 = sbr.rel (%p259) target = $region48
      $region47: #{tpu_custom_call.1} parent=5 // pred_region
        %s263 = ssub.s32 %s16, 1
        %p264 = scmp.lt.s32.totalorder %s25, 1
        %s265 = scalar_select %p264, %s25, 1
        %p266 = scmp.lt.s32.totalorder %s26, 0
        %s267 = scalar_select %p266, %s26, 0
        %s268 = sadd.s32 %s267, %s265
        %s269 = smul.addr %s268, 4
        %s270 = scalar_lea.vmem %s0, %s269
        %p271 = pneg %p56
        %p272 = pneg %p53
        %p273 = pneg %p77
        %p274 = pneg %p74
        %p275 = pneg %p98
        %p276 = pneg %p95
        %p277 = pneg %p119
        %p278 = pneg %p116
        %p279 = pneg %p140
        %p280 = pneg %p137
        %p281 = pneg %p161
        %p282 = pneg %p158
        %p283 = pneg %p182
        %p284 = pneg %p179
        %p285 = pneg %p210
        %p286 = pneg %p207
        %s287 = sand.u32 %s197, 1
        %s288 = scalar_lea.sflag [#allocation7], %s287
        %s289 = sand.u32 %s197, 1
        %s290 = smul.addr %s289, 8
        %s291 = scalar_lea.vmem [#allocation6], %s290
        %p292 = scmp.lt.s32.totalorder %s25, 1
        %s293 = scalar_select %p292, %s25, 1
        %p294 = scmp.lt.s32.totalorder %s26, 0
        %s295 = scalar_select %p294, %s26, 0
        %s296 = sadd.s32 %s295, %s293
        %s297 = smul.addr %s296, 4
        %s298 = scalar_lea.vmem %s0, %s297
        %v299 = vld [vmem:[%s298] sm:$0xf]
        %p300 = scmp.eq.s32.totalorder %s26, 0
        // Predicated region
        $region49: #{tpu_custom_call.1} parent=47 // pred_check
          %p301 = pneg %p300
        $region50: #{tpu_custom_call.1} parent=47 // pred_check_branch
          %303 = sbr.rel (%p301) target = $region52
        $region51: #{tpu_custom_call.1} parent=47 // pred_region
          %304 = vst [vmem:[#allocation2] sm:$0xf] 0.0
          %305 = vst [vmem:[#allocation4] sm:$0xff] 0.0
        $region52: #{tpu_custom_call.1} parent=47 // pred_fallthru
          _
        %vm306 = vcmask 125952
        %307 = vst.msk [vmem:[#allocation2 + $0x4] sm:$0xf] %vm306, %v299
        %v308 = vld [vmem:[#allocation2] sm:$0xff]
        %v310 = vcombine.high %v308, %v308
        %311 = vrot.lane.b32.xlu0 %v308, 4
        %v312 = vpop.permute.xlu0 %311
        %313 = vrot.lane.b32.xlu0 %v310, 4
        %v314 = vpop.permute.xlu0 %313
        %vm315 = vcmask 31744
        %v316 = vsel %vm315, %v312, %v314
        %318 = vst.msk [vmem:[#allocation3] sm:$0xf] %vm306, %v316
        %319 = vrot.lane.b32.xlu0 %v308, 2
        %v320 = vpop.permute.xlu0 %319
        %321 = vrot.lane.b32.xlu0 %v310, 2
        %v322 = vpop.permute.xlu0 %321
        %vm323 = vcmask 15360
        %v324 = vsel %vm323, %v320, %v322
        %326 = vst.msk [vmem:[#allocation3 + $0x4] sm:$0xf] %vm306, %v324
        %328 = vst.msk [vmem:[#allocation3 + $0x8] sm:$0xf] %vm306, %v310
        %v329 = vld [vmem:[%s1] sm:$0xff]
        %v330 = vld [vmem:[#allocation3] sm:$0xff]
        %v331 = vld [vmem:[#allocation3 + $0x8] sm:$0xf]
        %v332 = vld [vmem:[%s2] sm:$0xff]
        %334 = vset.pattern.permute.xlu0 0
        %335 = vperm.xlu0 %334, %v332
        %v336 = vpop.permute.xlu0 %335
        %vm338 = vcmask 97280
        %v340 = vsel %vm338, %v329, 0
        %vm342 = vcmask 1043456
        %v344 = vsel %vm342, %v331, 0
        %346 = vmatprep.subr.mxu0 0.0
        %347 = vmatpush1.msra.mxu0 0.0
        %348 = vmatprep.subr.mxu0 0.0
        %349 = vmatpush1.msra.mxu0 0.0
        %350 = vmatprep.subr.mxu0 0.0
        %351 = vmatpush1.msra.mxu0 0.0
        %352 = vmatprep.subr.mxu0 0.0
        %353 = vmatpush1.msra.mxu0 0.0
        %354 = vmatprep.subr.mxu0 0.0
        %355 = vmatpush1.msra.mxu0 0.0
        %356 = vmatprep.subr.mxu0 0.0
        %357 = vmatpush1.msra.mxu0 0.0
        %358 = vmatprep.subr.mxu0 0.0
        %359 = vmatpush1.msra.mxu0 0.0
        %360 = vmatprep.subr.mxu0 0.0
        %361 = vmatpush1.msra.mxu0 0.0
        %362 = vmatprep.subr.mxu0 0.0
        %363 = vmatpush1.msra.mxu0 0.0
        %364 = vmatprep.subr.mxu0 0.0
        %365 = vmatpush1.msra.mxu0 0.0
        %366 = vmatprep.subr.mxu0 0.0
        %367 = vmatpush1.msra.mxu0 0.0
        %368 = vmatprep.subr.mxu0 0.0
        %369 = vmatpush1.msra.mxu0 0.0
        %370 = vmatprep.subr.mxu0 0.0
        %371 = vmatpush1.msra.mxu0 0.0
        %372 = vmatprep.subr.mxu0 0.0
        %373 = vmatpush1.msra.mxu0 0.0
        %374 = vmatprep.subr.mxu0 0.0
        %375 = vmatpush1.msra.mxu0 %v344
        %376 = vmatprep.subr.mxu0 0.0
        %377 = vmatpush1.msra.mxu0 %v330
        %378 = vmatprep.subr.mxu0 0.0
        %379 = vmatpush2.msra.mxu0 0.0
        %380 = vmatprep.subr.mxu0 0.0
        %381 = vmatpush2.msra.mxu0 0.0
        %382 = vmatprep.subr.mxu0 0.0
        %383 = vmatpush2.msra.mxu0 0.0
        %384 = vmatprep.subr.mxu0 0.0
        %385 = vmatpush2.msra.mxu0 0.0
        %386 = vmatprep.subr.mxu0 0.0
        %387 = vmatpush2.msra.mxu0 0.0
        %388 = vmatprep.subr.mxu0 0.0
        %389 = vmatpush2.msra.mxu0 0.0
        %390 = vmatprep.subr.mxu0 0.0
        %391 = vmatpush2.msra.mxu0 0.0
        %392 = vmatprep.subr.mxu0 0.0
        %393 = vmatpush2.msra.mxu0 0.0
        %394 = vmatprep.subr.mxu0 0.0
        %395 = vmatpush2.msra.mxu0 0.0
        %396 = vmatprep.subr.mxu0 0.0
        %397 = vmatpush2.msra.mxu0 0.0
        %398 = vmatprep.subr.mxu0 0.0
        %399 = vmatpush2.msra.mxu0 0.0
        %400 = vmatprep.subr.mxu0 0.0
        %401 = vmatpush2.msra.mxu0 0.0
        %402 = vmatprep.subr.mxu0 0.0
        %403 = vmatpush2.msra.mxu0 0.0
        %404 = vmatprep.subr.mxu0 0.0
        %405 = vmatpush2.msra.mxu0 0.0
        %406 = vmatprep.subr.mxu0 0.0
        %407 = vmatpush2.msra.mxu0 0.0
        %408 = vmatprep.subr.mxu0 0.0
        %409 = vmatpush2.msra.mxu0 0.0
        %410 = vmatprep.mubr.f32.mxu0 0.0
        %411 = vmatmul.mubr.f32.gmra.mxu0 %v340
        %v412 = vpop.f32.mrf.mxu0
        %v413 = vadd.f32 %v336, %v412
        %v414 = vpop.f32.mrf.mxu0
        %415 = vdwg.mxu0
        %v416 = vmax.f32 %v413, 0.0
        %vm417 = vcmask 130048
        %418 = vst.msk [vmem:[#allocation4 + $0x8] sm:$0xff] %vm417, %v416
        %v419 = vld [vmem:[#allocation4] sm:$0xff]
        %v420 = vld [vmem:[#allocation4 + $0x8] sm:$0xff]
        %423 = vrot.lane.b32.xlu0 %v419, 4
        %v424 = vpop.permute.xlu0 %423
        %425 = vrot.lane.b32.xlu0 %v420, 4
        %v426 = vpop.permute.xlu0 %425
        %v427 = vsel %vm315, %v424, %v426
        %429 = vst.msk [vmem:[#allocation5] sm:$0xff] %vm417, %v427
        %430 = vrot.lane.b32.xlu0 %v419, 2
        %v431 = vpop.permute.xlu0 %430
        %432 = vrot.lane.b32.xlu0 %v420, 2
        %v433 = vpop.permute.xlu0 %432
        %v434 = vsel %vm323, %v431, %v433
        %436 = vst.msk [vmem:[#allocation5 + $0x8] sm:$0xff] %vm417, %v434
        %437 = vst.msk [vmem:[#allocation5 + $0x10] sm:$0xff] %vm417, %v420
        %v438 = vld [vmem:[%s3] sm:$0xff]
        %v439 = vld [vmem:[#allocation5] sm:$0xff]
        %v440 = vld [vmem:[#allocation5 + $0x8] sm:$0xff]
        %v441 = vld [vmem:[#allocation5 + $0x10] sm:$0xff]
        %v442 = vld [vmem:[%s4] sm:$0xff]
        %444 = vset.pattern.permute.xlu0 0
        %445 = vperm.xlu0 %444, %v442
        %v446 = vpop.permute.xlu0 %445
        %vm448 = vcmask 195584
        %v450 = vsel %vm448, %v438, 0
        %452 = vmatprep.subr.mxu0 0.0
        %453 = vmatpush1.msra.mxu0 0.0
        %454 = vmatprep.subr.mxu0 0.0
        %455 = vmatpush1.msra.mxu0 0.0
        %456 = vmatprep.subr.mxu0 0.0
        %457 = vmatpush1.msra.mxu0 0.0
        %458 = vmatprep.subr.mxu0 0.0
        %459 = vmatpush1.msra.mxu0 0.0
        %460 = vmatprep.subr.mxu0 0.0
        %461 = vmatpush1.msra.mxu0 0.0
        %462 = vmatprep.subr.mxu0 0.0
        %463 = vmatpush1.msra.mxu0 0.0
        %464 = vmatprep.subr.mxu0 0.0
        %465 = vmatpush1.msra.mxu0 0.0
        %466 = vmatprep.subr.mxu0 0.0
        %467 = vmatpush1.msra.mxu0 0.0
        %468 = vmatprep.subr.mxu0 0.0
        %469 = vmatpush1.msra.mxu0 0.0
        %470 = vmatprep.subr.mxu0 0.0
        %471 = vmatpush1.msra.mxu0 0.0
        %472 = vmatprep.subr.mxu0 0.0
        %473 = vmatpush1.msra.mxu0 0.0
        %474 = vmatprep.subr.mxu0 0.0
        %475 = vmatpush1.msra.mxu0 0.0
        %476 = vmatprep.subr.mxu0 0.0
        %477 = vmatpush1.msra.mxu0 0.0
        %478 = vmatprep.subr.mxu0 0.0
        %479 = vmatpush1.msra.mxu0 %v441
        %480 = vmatprep.subr.mxu0 0.0
        %481 = vmatpush1.msra.mxu0 %v440
        %482 = vmatprep.subr.mxu0 0.0
        %483 = vmatpush1.msra.mxu0 %v439
        %484 = vmatprep.subr.mxu0 0.0
        %485 = vmatpush2.msra.mxu0 0.0
        %486 = vmatprep.subr.mxu0 0.0
        %487 = vmatpush2.msra.mxu0 0.0
        %488 = vmatprep.subr.mxu0 0.0
        %489 = vmatpush2.msra.mxu0 0.0
        %490 = vmatprep.subr.mxu0 0.0
        %491 = vmatpush2.msra.mxu0 0.0
        %492 = vmatprep.subr.mxu0 0.0
        %493 = vmatpush2.msra.mxu0 0.0
        %494 = vmatprep.subr.mxu0 0.0
        %495 = vmatpush2.msra.mxu0 0.0
        %496 = vmatprep.subr.mxu0 0.0
        %497 = vmatpush2.msra.mxu0 0.0
        %498 = vmatprep.subr.mxu0 0.0
        %499 = vmatpush2.msra.mxu0 0.0
        %500 = vmatprep.subr.mxu0 0.0
        %501 = vmatpush2.msra.mxu0 0.0
        %502 = vmatprep.subr.mxu0 0.0
        %503 = vmatpush2.msra.mxu0 0.0
        %504 = vmatprep.subr.mxu0 0.0
        %505 = vmatpush2.msra.mxu0 0.0
        %506 = vmatprep.subr.mxu0 0.0
        %507 = vmatpush2.msra.mxu0 0.0
        %508 = vmatprep.subr.mxu0 0.0
        %509 = vmatpush2.msra.mxu0 0.0
        %510 = vmatprep.subr.mxu0 0.0
        %511 = vmatpush2.msra.mxu0 0.0
        %512 = vmatprep.subr.mxu0 0.0
        %513 = vmatpush2.msra.mxu0 0.0
        %514 = vmatprep.subr.mxu0 0.0
        %515 = vmatpush2.msra.mxu0 0.0
        %516 = vmatprep.mubr.f32.mxu0 0.0
        %517 = vmatmul.mubr.f32.gmra.mxu0 %v450
        %v518 = vpop.f32.mrf.mxu0
        %v519 = vadd.f32 %v446, %v518
        %v520 = vpop.f32.mrf.mxu0
        %521 = vdwg.mxu0
        %v522 = vmax.f32 %v519, 0.0
        %v523 = vld [vmem:[%s5] sm:$0xff]
        %v524 = vld [vmem:[%s6] sm:$0xff]
        %526 = vset.pattern.permute.xlu0 0
        %527 = vperm.xlu0 %526, %v524
        %v528 = vpop.permute.xlu0 %527
        %v531 = vsel %vm315, %v523, 0
        %v534 = vsel %vm342, %v299, 0
        %536 = vmatprep.subr.mxu0 0.0
        %537 = vmatpush1.msra.mxu0 0.0
        %538 = vmatprep.subr.mxu0 0.0
        %539 = vmatpush1.msra.mxu0 0.0
        %540 = vmatprep.subr.mxu0 0.0
        %541 = vmatpush1.msra.mxu0 0.0
        %542 = vmatprep.subr.mxu0 0.0
        %543 = vmatpush1.msra.mxu0 0.0
        %544 = vmatprep.subr.mxu0 0.0
        %545 = vmatpush1.msra.mxu0 0.0
        %546 = vmatprep.subr.mxu0 0.0
        %547 = vmatpush1.msra.mxu0 0.0
        %548 = vmatprep.subr.mxu0 0.0
        %549 = vmatpush1.msra.mxu0 0.0
        %550 = vmatprep.subr.mxu0 0.0
        %551 = vmatpush1.msra.mxu0 0.0
        %552 = vmatprep.subr.mxu0 0.0
        %553 = vmatpush1.msra.mxu0 0.0
        %554 = vmatprep.subr.mxu0 0.0
        %555 = vmatpush1.msra.mxu0 0.0
        %556 = vmatprep.subr.mxu0 0.0
        %557 = vmatpush1.msra.mxu0 0.0
        %558 = vmatprep.subr.mxu0 0.0
        %559 = vmatpush1.msra.mxu0 0.0
        %560 = vmatprep.subr.mxu0 0.0
        %561 = vmatpush1.msra.mxu0 0.0
        %562 = vmatprep.subr.mxu0 0.0
        %563 = vmatpush1.msra.mxu0 0.0
        %564 = vmatprep.subr.mxu0 0.0
        %565 = vmatpush1.msra.mxu0 0.0
        %566 = vmatprep.subr.mxu0 0.0
        %567 = vmatpush1.msra.mxu0 %v534
        %568 = vmatprep.subr.mxu0 0.0
        %569 = vmatpush2.msra.mxu0 0.0
        %570 = vmatprep.subr.mxu0 0.0
        %571 = vmatpush2.msra.mxu0 0.0
        %572 = vmatprep.subr.mxu0 0.0
        %573 = vmatpush2.msra.mxu0 0.0
        %574 = vmatprep.subr.mxu0 0.0
        %575 = vmatpush2.msra.mxu0 0.0
        %576 = vmatprep.subr.mxu0 0.0
        %577 = vmatpush2.msra.mxu0 0.0
        %578 = vmatprep.subr.mxu0 0.0
        %579 = vmatpush2.msra.mxu0 0.0
        %580 = vmatprep.subr.mxu0 0.0
        %581 = vmatpush2.msra.mxu0 0.0
        %582 = vmatprep.subr.mxu0 0.0
        %583 = vmatpush2.msra.mxu0 0.0
        %584 = vmatprep.subr.mxu0 0.0
        %585 = vmatpush2.msra.mxu0 0.0
        %586 = vmatprep.subr.mxu0 0.0
        %587 = vmatpush2.msra.mxu0 0.0
        %588 = vmatprep.subr.mxu0 0.0
        %589 = vmatpush2.msra.mxu0 0.0
        %590 = vmatprep.subr.mxu0 0.0
        %591 = vmatpush2.msra.mxu0 0.0
        %592 = vmatprep.subr.mxu0 0.0
        %593 = vmatpush2.msra.mxu0 0.0
        %594 = vmatprep.subr.mxu0 0.0
        %595 = vmatpush2.msra.mxu0 0.0
        %596 = vmatprep.subr.mxu0 0.0
        %597 = vmatpush2.msra.mxu0 0.0
        %598 = vmatprep.subr.mxu0 0.0
        %599 = vmatpush2.msra.mxu0 0.0
        %600 = vmatprep.mubr.f32.mxu0 0.0
        %601 = vmatmul.mubr.f32.gmra.mxu0 %v531
        %v602 = vpop.f32.mrf.mxu0
        %v603 = vadd.f32 %v528, %v602
        %v604 = vpop.f32.mrf.mxu0
        %605 = vdwg.mxu0
        %v606 = vadd.f32 %v522, %v603
        %v607 = vmax.f32 %v606, 0.0
        %608 = vst.msk [vmem:[%s291] sm:$0xff] %vm417, %v607
        %s609 = sand.u32 %s197, 1
        %s610 = scalar_lea.sflag [#allocation7], %s609
        %s611 = sand.u32 %s197, 1
        %s612 = smul.addr %s611, 8
        %s613 = scalar_lea.vmem [#allocation6], %s612
        // Predicated region
        $region53: #{tpu_custom_call.1} parent=47 // pred_check
          %p614 = pneg %p207
        $region54: #{tpu_custom_call.1} parent=47 // pred_check_branch
          %616 = sbr.rel (%p614) target = $region56
        $region55: #{tpu_custom_call.1} parent=47 // pred_region
          %s618 = ssub.s32 128, 128
          %619 = vsyncadd %s610, %s618
          %s620 = sadd.s32 %s26, %s25
          %s621 = smul.addr %s620, 128
          %s622 = scalar_lea.hbm %s7, %s621
          %s624 = sshll.u32 %s613, 4
          %s625 = int_to_ptr.vmem [resolvable:$true] %s624
          %627 = dma.vmem_to_hbm [thread:$0]  %s625, 128, %s622, %s610
        $region56: #{tpu_custom_call.1} parent=47 // pred_fallthru
          _
      $region48: #{tpu_custom_call.1} parent=5 // pred_fallthru
        _
      %p628 = scmp.le.s32.totalorder 2, %s16
      // Predicated region
      $region57: #{tpu_custom_call.1} parent=5 // pred_check
        %p629 = pneg %p628
      $region58: #{tpu_custom_call.1} parent=5 // pred_check_branch
        %631 = sbr.rel (%p629) target = $region60
      $region59: #{tpu_custom_call.1} parent=5 // pred_region
        %s632 = ssub.s32 %s16, 2
        // Predicated region
        $region61: #{tpu_custom_call.1} parent=59 // pred_check
          %p633 = pneg %p213
        $region62: #{tpu_custom_call.1} parent=59 // pred_check_branch
          %635 = sbr.rel (%p633) target = $region64
        $region63: #{tpu_custom_call.1} parent=59 // pred_region
          %s636 = sand.u32 %s198, 1
          %s637 = scalar_lea.sflag [#allocation7], %s636
          %s638 = sand.u32 %s198, 1
          %s639 = smul.addr %s638, 8
          %s640 = scalar_lea.vmem [#allocation6], %s639
          %641 = dma.done %s637, 128
        $region64: #{tpu_custom_call.1} parent=59 // pred_fallthru
          _
      $region60: #{tpu_custom_call.1} parent=5 // pred_fallthru
        _
    $region6: #{tpu_custom_call.1} parent=1 // loop_footer
      %s20 = sadd.s32 1, %s16
    $region7: #{tpu_custom_call.1} parent=1 // loop_footer_branch
      %15 = sbr.rel target = $region3
    $region8: #{tpu_custom_call.1} parent=1 // loop_exit
      _
    %642 = vsyncpa [#allocation7], 1
    %s643 = scalar_lea.sflag [#allocation7], 1
    %644 = vsyncpa %s643, 1

</llo_original>
